<compile_context>
chip_gen: v7x
topology: tpu7x:2x2x1
jax: 0.10.0
libtpu: 0.0.40
codegen_flags: <defaults>
</compile_context>

<pallas_src>
import jax
import jax.numpy as jnp
from jax.experimental import pallas as pl
from jax.experimental.pallas import tpu as pltpu

_LANES = 128            # vreg lane width -> lane-dense last dim (unmasked vst)
_MAX_TILE_ROWS = 4096   # (4096,128) f32 = 2 MiB tile; 2 in + 2 out bufs ~= 8 MiB VMEM
_MIN_TILE_ROWS = 8      # sublane-aligned minimum
_TARGET_GRID_STEPS = 8  # ~4 steps per TC on v7x's 2 cores; keeps pipeline overlapped
# Below this, XLA's single fused elementwise op matches the kernel and avoids
# pallas_call dispatch overhead.  TODO(synk): tune by measurement per generation.
_KERNEL_MIN_N = 65536


def _pick_tile_rows(m):
    """Rows per tile: multiple of 8, ~_TARGET_GRID_STEPS grid steps, capped at 2 MiB."""
    rows = pl.cdiv(m, _TARGET_GRID_STEPS)
    rows = ((rows + 7) // 8) * 8
    return max(_MIN_TILE_ROWS, min(_MAX_TILE_ROWS, rows))


def _logreg_kernel(w_ref, b_ref, x_ref, o_ref):
    # w_ref: (1,) SMEM, b_ref: (1,) SMEM  -- the Linear(1,1) parameters.
    # x_ref / o_ref: (tile_rows, 128) VMEM tiles of the lane-dense slab.
    w = w_ref[0]
    b = b_ref[0]
    z = x_ref[...] * w + b                     # Linear(1,1) is a scalar FMA (VPU)
    # sigmoid(z) == 0.5 * tanh(0.5 * z) + 0.5 : single EUP op per element.
    o_ref[...] = 0.5 * jnp.tanh(0.5 * z) + 0.5


def _logreg_pallas(x_flat, weight, bias):
    n = x_flat.shape[0]                        # caller guarantees n % 128 == 0
    m = n // _LANES
    slab = x_flat.reshape(m, _LANES)           # free view of contiguous data
    tile_rows = _pick_tile_rows(m)
    grid = (pl.cdiv(m, tile_rows),)            # last block may be partial -> Pallas clips

    out = pl.pallas_call(
        _logreg_kernel,
        out_shape=jax.ShapeDtypeStruct((m, _LANES), jnp.float32),
        grid=grid,
        in_specs=[
            pl.BlockSpec(memory_space=pltpu.MemorySpace.SMEM),      # weight (1,)
            pl.BlockSpec(memory_space=pltpu.MemorySpace.SMEM),      # bias (1,)
            pl.BlockSpec((tile_rows, _LANES), lambda i: (i, 0)),    # x row-tile
        ],
        out_specs=pl.BlockSpec((tile_rows, _LANES), lambda i: (i, 0)),
        compiler_params=pltpu.CompilerParams(
            dimension_semantics=("parallel",),  # megacore sharding on v7x; no-op elsewhere
            vmem_limit_bytes=32 * 1024 * 1024,
        ),
        cost_estimate=pl.CostEstimate(
            flops=4 * n,                        # affine + tanh rescale per element
            transcendentals=n,                  # one tanh per element
            bytes_accessed=8 * n,               # 4 B in + 4 B out per element
        ),
    )(weight.reshape(1), bias, slab)

    return out.reshape(n, 1)                    # free reshape back to PyTorch shape


def logistic_regression(x, weight, bias, *, force_kernel=False):
    """x: (N, 1) f32; weight: (1, 1); bias: (1,) -> sigmoid(x @ W^T + b), shape (N, 1)."""
    x = x.astype(jnp.float32)
    weight = weight.astype(jnp.float32)
    bias = bias.astype(jnp.float32)
    n = x.shape[0]
    # Kernel path only when it is zero-copy (N a multiple of 128) and big enough to
    # amortize dispatch.  Ragged / tiny N uses XLA's fused elementwise, which is
    # already at the HBM roofline for this op -- strictly better than padding.
    use_kernel = (n % _LANES == 0) and n >= _LANES and (force_kernel or n >= _KERNEL_MIN_N)
    if not use_kernel:
        return jax.nn.sigmoid(x @ weight.T + bias)
    return _logreg_pallas(x.reshape(-1), weight, bias)


if __name__ == "__main__":
    key = jax.random.PRNGKey(0)
    kx_small, kx_mid, kx_ragged, kw, kb = jax.random.split(key, 5)

    # Deterministic parameter init mimicking torch.nn.Linear(1, 1): U(-1, 1).
    weight = jax.random.uniform(kw, (1, 1), jnp.float32, minval=-1.0, maxval=1.0)
    bias = jax.random.uniform(kb, (1,), jnp.float32, minval=-1.0, maxval=1.0)

    # 1) Tiny batch (the module's toy regime): plain-JAX path of the wrapper.
    x_small = jax.random.normal(kx_small, (8, 1), jnp.float32)
    y_small = logistic_regression(x_small, weight, bias)
    jax.block_until_ready(y_small)
    ref_small = jax.nn.sigmoid(x_small @ weight.T + bias)
    assert y_small.shape == (8, 1)
    assert jnp.allclose(y_small, ref_small, atol=1e-6)

    # 2) Pallas kernel path: N = 200*128 -> m = 200 rows, adaptive tile_rows = 32,
    #    grid = (7,) with a partial last row-tile, so the multi-step index_map and
    #    edge-block clipping are both exercised, all with zero wrapper copies.
    n_mid = 200 * _LANES
    x_mid = jax.random.normal(kx_mid, (n_mid, 1), jnp.float32)
    y_mid = logistic_regression(x_mid, weight, bias, force_kernel=True)
    jax.block_until_ready(y_mid)
    ref_mid = jax.nn.sigmoid(x_mid @ weight.T + bias)
    assert y_mid.shape == (n_mid, 1)
    assert jnp.allclose(y_mid, ref_mid, atol=1e-6), float(jnp.max(jnp.abs(y_mid - ref_mid)))

    # 3) Ragged N (not a multiple of 128): routed to the fused-XLA fallback rather
    #    than paying pad/slice HBM copies; verify correctness of the dispatch.
    x_ragged = jax.random.normal(kx_ragged, (2000, 1), jnp.float32)
    y_ragged = logistic_regression(x_ragged, weight, bias, force_kernel=True)
    jax.block_until_ready(y_ragged)
    ref_ragged = jax.nn.sigmoid(x_ragged @ weight.T + bias)
    assert y_ragged.shape == (2000, 1)
    assert jnp.allclose(y_ragged, ref_ragged, atol=1e-6)

    print("KERNEL_OK")
</pallas_src>

<mosaic_0001>
module attributes {stable_mosaic.version = 11 : i64} {
  func.func @_logreg_kernel(%arg0: i32, %arg1: memref<1xf32, #tpu.memory_space<smem>>, %arg2: memref<1xf32, #tpu.memory_space<smem>>, %arg3: memref<32x128xf32, #tpu.memory_space<vmem>>, %arg4: memref<32x128xf32, #tpu.memory_space<vmem>>) attributes {dimension_semantics = [#tpu.dimension_semantics<parallel>], iteration_bounds = array<i64: 7>, scalar_prefetch = 0 : i64, scratch_operands = 0 : i64, tpu.core_type = #tpu.core_type<tc>, window_params = [{transform_indices = @transform_0, window_bounds = array<i64: 1>}, {transform_indices = @transform_1, window_bounds = array<i64: 1>}, {transform_indices = @transform_2, window_bounds = array<i64: 32, 128>}, {transform_indices = @transform_3, window_bounds = array<i64: 32, 128>}]} {
    %c0 = arith.constant 0 : index
    %0 = memref.load %arg1[%c0] : memref<1xf32, #tpu.memory_space<smem>>
    %c0_0 = arith.constant 0 : index
    %1 = memref.load %arg2[%c0_0] : memref<1xf32, #tpu.memory_space<smem>>
    %c0_1 = arith.constant 0 : index
    %c0_2 = arith.constant 0 : index
    %2 = vector.load %arg3[%c0_1, %c0_2] : memref<32x128xf32, #tpu.memory_space<vmem>>, vector<32x128xf32>
    %3 = vector.broadcast %0 : f32 to vector<32x128xf32>
    %4 = arith.mulf %2, %3 : vector<32x128xf32>
    %5 = vector.broadcast %1 : f32 to vector<32x128xf32>
    %6 = arith.addf %4, %5 : vector<32x128xf32>
    %cst = arith.constant 5.000000e-01 : f32
    %7 = vector.broadcast %cst : f32 to vector<32x128xf32>
    %8 = arith.mulf %7, %6 : vector<32x128xf32>
    %9 = math.tanh %8 : vector<32x128xf32>
    %cst_3 = arith.constant 5.000000e-01 : f32
    %10 = vector.broadcast %cst_3 : f32 to vector<32x128xf32>
    %11 = arith.mulf %10, %9 : vector<32x128xf32>
    %cst_4 = arith.constant 5.000000e-01 : f32
    %12 = vector.broadcast %cst_4 : f32 to vector<32x128xf32>
    %13 = arith.addf %11, %12 : vector<32x128xf32>
    %c0_5 = arith.constant 0 : index
    %c0_6 = arith.constant 0 : index
    %14 = vector.load %arg4[%c0_5, %c0_6] : memref<32x128xf32, #tpu.memory_space<vmem>>, vector<32x128xf32>
    tpu.vector_store %arg4[%c0_5, %c0_6], %13 {strides = array<i32>} : memref<32x128xf32, #tpu.memory_space<vmem>>, vector<32x128xf32>,
    return
  }
  func.func @transform_0(%arg0: i32) -> i32 {
    %c0_i32 = arith.constant 0 : i32
    %c0_i32_0 = arith.constant 0 : i32
    return %c0_i32 : i32
  }
  func.func @transform_1(%arg0: i32) -> i32 {
    %c0_i32 = arith.constant 0 : i32
    %c0_i32_0 = arith.constant 0 : i32
    return %c0_i32 : i32
  }
  func.func @transform_2(%arg0: i32) -> (i32, i32) {
    %c0_i32 = arith.constant 0 : i32
    %c0_i32_0 = arith.constant 0 : i32
    return %arg0, %c0_i32 : i32, i32
  }
  func.func @transform_3(%arg0: i32) -> (i32, i32) {
    %c0_i32 = arith.constant 0 : i32
    %c0_i32_0 = arith.constant 0 : i32
    return %arg0, %c0_i32 : i32, i32
  }
}

</mosaic_0001>

<llo_original>
// kernel: tpu_custom_call.1
$region0: #{tpu_custom_call.1}
  #allocation0 [shape = 'u32[]', space=smem, size = 0x4, offset = 0x4, fixed_abs, tag = 'smem constant byte address 0x4 - core index']
  #allocation1 [shape = 'u32[144,128]{1,0:T(1,128)}', space=vmem, size = 0x12000, scoped, tag = 'internal scratch']
  #allocation2 [shape = 'f32[1]{0:T(128)S(6)}', space=smem, size = 0x200, scoped, tag = 'scoped memory for tpu_custom_call.1']
  #allocation3 [shape = 'f32[1]{0:T(128)S(6)}', space=smem, size = 0x200, scoped, tag = 'scoped memory for tpu_custom_call.1']
  %s0 = inlined_call_operand.<no memory space> [shape: f32[1], index: 0, kind: input, shape index: {}]
  %s1 = inlined_call_operand.<no memory space> [shape: f32[1], index: 1, kind: input, shape index: {}]
  %s2 = inlined_call_operand.hbm [shape: f32[200,128], index: 2, kind: input, shape index: {}]
  %s3 = inlined_call_operand.hbm [shape: f32[200,128], index: 3, kind: output, shape index: {}]
  %s4 = sld [smem:[#allocation0]]
  $region49: #{tpu_custom_call.1} parent=0
    _
  %s6 = ssub.s32 1, %s4
  %s7 = scalar_select 0, %s6, %s4
  %8 = sst [smem:[#allocation2]] %s0
  %9 = sst [smem:[#allocation3]] %s1
  $region1: #{tpu_custom_call.1} parent=0
    #allocation4 [shape = 'u8[32768]{0}', space=vmem, size = 0x8000, scoped, tag = 'input window, operand 2']
    #allocation5 [shape = 's32[2]{0}', space=sflag, size = 0x8, scoped, tag = 'scoped memory for tpu_custom_call.1']
    #allocation6 [shape = 's32[2]{0}', space=sflag, size = 0x8, scoped, tag = 'scoped memory for tpu_custom_call.1']
    #allocation7 [shape = 'u8[32768]{0}', space=vmem, size = 0x8000, scoped, tag = 'output window, operand 0']
    %10 = vsyncpa [#allocation5], 0
    %s11 = scalar_lea.sflag [#allocation5], 1
    %12 = vsyncpa %s11, 0
    %13 = vsyncpa [#allocation6], 0
    %s14 = scalar_lea.sflag [#allocation6], 1
    %15 = vsyncpa %s14, 0
    loop: start=0, step=1, limit=9
    $region2: #{tpu_custom_call.1} parent=1 // loop_pre_header
      _
    $region3: #{tpu_custom_call.1} parent=1 // loop_header
      %s17 = sphi 0, %s21
      %p18 = scmp.ge.s32.totalorder %s17, 9
      %s25 = sphi 0, %s25
      %s27 = sphi 0, %s25
      %s28 = sphi 0, %s27
      %s42 = sphi 0, %s28
      %s46 = sphi 0, %s46
      %s48 = sphi 0, %s46
      %s49 = sphi 0, %s48
      %s63 = sphi 0, %s49
      %s69 = sphi 0, %s71
      %s72 = sphi 0, %s69
      %s73 = sphi 0, %s72
      %s89 = sphi 0, %s73
      %s95 = sphi 0, %s97
      %s98 = sphi 0, %s95
      %s99 = sphi 0, %s98
      %s115 = sphi 0, %s99
    $region4: #{tpu_custom_call.1} parent=1 // loop_header_branch
      %20 = sbr.rel (%p18) target = $region8
    $region5: #{tpu_custom_call.1} parent=1 // loop_body
      %s22 = ssub.s32 %s17, 1
      %s23 = ssub.s32 %s17, 2
      %s24 = sadd.s32 %s17, 1
      %s26 = sadd.s32 %s25, 1
      %p29 = scmp.eq.s32.totalorder %s17, 6
      %p30 = scmp.ne.s32.totalorder %s25, %s27
      %p31 = scmp.eq.s32.totalorder %s17, 0
      %p32 = por %p30, %p31
      %p33 = scmp.ne.s32.totalorder %s25, %s27
      %p34 = scmp.eq.s32.totalorder %s22, 6
      %p35 = por %p33, %p34
      %p36 = scmp.ne.s32.totalorder %s27, %s28
      %p37 = scmp.eq.s32.totalorder %s22, 0
      %p38 = por %p36, %p37
      %p39 = scmp.ne.s32.totalorder %s27, %s28
      %p40 = scmp.eq.s32.totalorder %s23, 6
      %p41 = por %p39, %p40
      %p43 = scmp.ne.s32.totalorder %s28, %s42
      %p44 = scmp.eq.s32.totalorder %s23, 0
      %p45 = por %p43, %p44
      %s47 = sadd.s32 %s46, 1
      %p50 = scmp.eq.s32.totalorder %s17, 6
      %p51 = scmp.ne.s32.totalorder %s46, %s48
      %p52 = scmp.eq.s32.totalorder %s17, 0
      %p53 = por %p51, %p52
      %p54 = scmp.ne.s32.totalorder %s46, %s48
      %p55 = scmp.eq.s32.totalorder %s22, 6
      %p56 = por %p54, %p55
      %p57 = scmp.ne.s32.totalorder %s48, %s49
      %p58 = scmp.eq.s32.totalorder %s22, 0
      %p59 = por %p57, %p58
      %p60 = scmp.ne.s32.totalorder %s48, %s49
      %p61 = scmp.eq.s32.totalorder %s23, 6
      %p62 = por %p60, %p61
      %p64 = scmp.ne.s32.totalorder %s49, %s63
      %p65 = scmp.eq.s32.totalorder %s23, 0
      %p66 = por %p64, %p65
      %s67 = ssub.s32 %s17, %s24
      %p68 = scmp.eq.s32.totalorder %s67, 0
      %s70 = sadd.s32 %s69, 1
      %s71 = scalar_select %p68, %s69, %s70
      %p74 = pneg %p68
      %p75 = scmp.eq.s32.totalorder %s17, 6
      %p76 = por %p74, %p75
      %p77 = scmp.ne.s32.totalorder %s69, %s72
      %p78 = scmp.eq.s32.totalorder %s17, 0
      %p79 = por %p77, %p78
      %p80 = scmp.ne.s32.totalorder %s69, %s72
      %p81 = scmp.eq.s32.totalorder %s22, 6
      %p82 = por %p80, %p81
      %p83 = scmp.ne.s32.totalorder %s72, %s73
      %p84 = scmp.eq.s32.totalorder %s22, 0
      %p85 = por %p83, %p84
      %p86 = scmp.ne.s32.totalorder %s72, %s73
      %p87 = scmp.eq.s32.totalorder %s23, 6
      %p88 = por %p86, %p87
      %p90 = scmp.ne.s32.totalorder %s73, %s89
      %p91 = scmp.eq.s32.totalorder %s23, 0
      %p92 = por %p90, %p91
      %s93 = ssub.s32 %s17, %s24
      %p94 = scmp.eq.s32.totalorder %s93, 0
      %s96 = sadd.s32 %s95, 1
      %s97 = scalar_select %p94, %s95, %s96
      %p100 = pneg %p94
      %p101 = scmp.eq.s32.totalorder %s17, 6
      %p102 = por %p100, %p101
      %p103 = scmp.ne.s32.totalorder %s95, %s98
      %p104 = scmp.eq.s32.totalorder %s17, 0
      %p105 = por %p103, %p104
      %p106 = scmp.ne.s32.totalorder %s95, %s98
      %p107 = scmp.eq.s32.totalorder %s22, 6
      %p108 = por %p106, %p107
      %p109 = scmp.ne.s32.totalorder %s98, %s99
      %p110 = scmp.eq.s32.totalorder %s22, 0
      %p111 = por %p109, %p110
      %p112 = scmp.ne.s32.totalorder %s98, %s99
      %p113 = scmp.eq.s32.totalorder %s23, 6
      %p114 = por %p112, %p113
      %p116 = scmp.ne.s32.totalorder %s99, %s115
      %p117 = scmp.eq.s32.totalorder %s23, 0
      %p118 = por %p116, %p117
      %p119 = scmp.le.s32.totalorder 1, %s17
      %p120 = scmp.lt.s32.totalorder %s17, 8
      %p121 = pnand %p119, %p120
      %p122 = pneg %p121
      // Predicated region
      $region9: #{tpu_custom_call.1} parent=5 // pred_check
        _
      $region10: #{tpu_custom_call.1} parent=5 // pred_check_branch
        %124 = sbr.rel (%p121) target = $region12
      $region11: #{tpu_custom_call.1} parent=5 // pred_region
        %s125 = ssub.s32 %s17, 1
        // Predicated region
        $region13: #{tpu_custom_call.1} parent=11 // pred_check
          %p126 = pneg %p38
        $region14: #{tpu_custom_call.1} parent=11 // pred_check_branch
          %128 = sbr.rel (%p126) target = $region16
        $region15: #{tpu_custom_call.1} parent=11 // pred_region
          _
        $region16: #{tpu_custom_call.1} parent=11 // pred_fallthru
          _
        // Predicated region
        $region17: #{tpu_custom_call.1} parent=11 // pred_check
          %p129 = pneg %p59
        $region18: #{tpu_custom_call.1} parent=11 // pred_check_branch
          %131 = sbr.rel (%p129) target = $region20
        $region19: #{tpu_custom_call.1} parent=11 // pred_region
          _
        $region20: #{tpu_custom_call.1} parent=11 // pred_fallthru
          _
      $region12: #{tpu_custom_call.1} parent=5 // pred_fallthru
        _
      %p132 = scmp.lt.s32.totalorder %s17, 7
      // Predicated region
      $region21: #{tpu_custom_call.1} parent=5 // pred_check
        %p133 = pneg %p132
      $region22: #{tpu_custom_call.1} parent=5 // pred_check_branch
        %135 = sbr.rel (%p133) target = $region24
      $region23: #{tpu_custom_call.1} parent=5 // pred_region
        // Predicated region
        $region25: #{tpu_custom_call.1} parent=23 // pred_check
          %p136 = pneg %p79
        $region26: #{tpu_custom_call.1} parent=23 // pred_check_branch
          %138 = sbr.rel (%p136) target = $region28
        $region27: #{tpu_custom_call.1} parent=23 // pred_region
          %s139 = sand.u32 %s69, 1
          %s140 = scalar_lea.sflag [#allocation5], %s139
          %s141 = sand.u32 %s69, 1
          %s142 = smul.addr %s141, 32
          %s143 = scalar_lea.vmem [#allocation4], %s142
          %s144 = smul.u32 4, %s17
          %s145 = ssub.s32 25, %s144
          %p146 = scmp.lt.s32.totalorder %s145, 4
          %s147 = scalar_select %p146, %s145, 4
          %s148 = smul.u32 128, %s147
          %s150 = ssub.s32 512, %s148
          %151 = vsyncadd %s140, %s150
          %p152 = scmp.ne.s32.totalorder 0, %s148
          %s153 = smul.addr %s144, 128
          %s154 = scalar_lea.hbm %s2, %s153
          %s155 = smul.u32 8, %s147
          %s156 = sshll.u32 %s143, 4
          %s157 = int_to_ptr.vmem [resolvable:$true] %s156
          %s158 = sshll.u32 %s155, 4
          %162 = dma.hbm_to_vmem [thread:$0]  (%p152), %s154, %s158, %s157, %s140, 128, 128, 8
        $region28: #{tpu_custom_call.1} parent=23 // pred_fallthru
          _
      $region24: #{tpu_custom_call.1} parent=5 // pred_fallthru
        _
      %p163 = scmp.le.s32.totalorder 1, %s17
      %p164 = scmp.lt.s32.totalorder %s17, 8
      %p165 = pnand %p163, %p164
      %p166 = pneg %p165
      // Predicated region
      $region29: #{tpu_custom_call.1} parent=5 // pred_check
        _
      $region30: #{tpu_custom_call.1} parent=5 // pred_check_branch
        %168 = sbr.rel (%p165) target = $region32
      $region31: #{tpu_custom_call.1} parent=5 // pred_region
        %s169 = ssub.s32 %s17, 1
        %s170 = sand.u32 %s72, 1
        %s171 = scalar_lea.sflag [#allocation5], %s170
        %s172 = sand.u32 %s72, 1
        %s173 = smul.addr %s172, 32
        %s174 = scalar_lea.vmem [#allocation4], %s173
        // Predicated region
        $region33: #{tpu_custom_call.1} parent=31 // pred_check
          %p175 = pneg %p85
        $region34: #{tpu_custom_call.1} parent=31 // pred_check_branch
          %177 = sbr.rel (%p175) target = $region36
        $region35: #{tpu_custom_call.1} parent=31 // pred_region
          %178 = dma.done %s171, 512
        $region36: #{tpu_custom_call.1} parent=31 // pred_fallthru
          _
        %p179 = pneg %p38
        %p180 = pneg %p35
        %p181 = pneg %p59
        %p182 = pneg %p56
        %s183 = sand.u32 %s72, 1
        %s184 = scalar_lea.sflag [#allocation5], %s183
        %s185 = sand.u32 %s72, 1
        %s186 = smul.addr %s185, 32
        %s187 = scalar_lea.vmem [#allocation4], %s186
        %p188 = pneg %p85
        %p189 = pneg %p82
        %p190 = pneg %p111
        %p191 = pneg %p108
        %s192 = sand.u32 %s98, 1
        %s193 = scalar_lea.sflag [#allocation6], %s192
        %s194 = sand.u32 %s98, 1
        %s195 = smul.addr %s194, 32
        %s196 = scalar_lea.vmem [#allocation7], %s195
        %s197 = smul.u32 4, %s22
        %s198 = ssub.s32 25, %s197
        %p199 = scmp.lt.s32.totalorder %s198, 4
        %s200 = scalar_select %p199, %s198, 4
        %s201 = smul.u32 128, %s200
        %s202 = smul.u32 4, %s22
        %s203 = ssub.s32 25, %s202
        %p204 = scmp.lt.s32.totalorder %s203, 4
        %s205 = scalar_select %p204, %s203, 4
        %s206 = smul.u32 128, %s205
        %s207 = sld [smem:[#allocation2]]
        %s208 = sld [smem:[#allocation3]]
        %v209 = vld [vmem:[%s174] sm:$0xff]
        %v210 = vld [vmem:[%s174 + $0x8] sm:$0xff]
        %v211 = vld [vmem:[%s174 + $0x10] sm:$0xff]
        %v212 = vld [vmem:[%s174 + $0x18] sm:$0xff]
        %v213 = vstv %s207
        %v214 = vmul.f32 %v209, %v213
        %v215 = vmul.f32 %v210, %v213
        %v216 = vmul.f32 %v211, %v213
        %v217 = vmul.f32 %v212, %v213
        %v218 = vstv %s208
        %v219 = vadd.f32 %v214, %v218
        %v220 = vadd.f32 %v215, %v218
        %v221 = vadd.f32 %v216, %v218
        %v222 = vadd.f32 %v217, %v218
        %v223 = vmul.f32 %v219, 0.5
        %v224 = vmul.f32 %v220, 0.5
        %v225 = vmul.f32 %v221, 0.5
        %v226 = vmul.f32 %v222, 0.5
        %v227 = vtanh.pop %v223
        %v228 = vtanh.pop %v224
        %v229 = vtanh.pop %v225
        %v230 = vtanh.pop %v226
        %v231 = vmul.f32 %v227, 0.5
        %v232 = vmul.f32 %v228, 0.5
        %v233 = vmul.f32 %v229, 0.5
        %v234 = vmul.f32 %v230, 0.5
        %v235 = vadd.f32 %v231, 0.5
        %v236 = vadd.f32 %v232, 0.5
        %v237 = vadd.f32 %v233, 0.5
        %v238 = vadd.f32 %v234, 0.5
        %239 = vst [vmem:[%s196] sm:$0xff] %v235
        %240 = vst [vmem:[%s196 + $0x8] sm:$0xff] %v236
        %241 = vst [vmem:[%s196 + $0x10] sm:$0xff] %v237
        %242 = vst [vmem:[%s196 + $0x18] sm:$0xff] %v238
        %s243 = sand.u32 %s98, 1
        %s244 = scalar_lea.sflag [#allocation6], %s243
        %s245 = sand.u32 %s98, 1
        %s246 = smul.addr %s245, 32
        %s247 = scalar_lea.vmem [#allocation7], %s246
        // Predicated region
        $region37: #{tpu_custom_call.1} parent=31 // pred_check
          %p248 = pneg %p108
        $region38: #{tpu_custom_call.1} parent=31 // pred_check_branch
          %250 = sbr.rel (%p248) target = $region40
        $region39: #{tpu_custom_call.1} parent=31 // pred_region
          %s251 = smul.u32 4, %s22
          %s252 = ssub.s32 25, %s251
          %p253 = scmp.lt.s32.totalorder %s252, 4
          %s254 = scalar_select %p253, %s252, 4
          %s255 = smul.u32 128, %s254
          %s257 = ssub.s32 512, %s255
          %258 = vsyncadd %s244, %s257
          %p259 = scmp.ne.s32.totalorder 0, %s255
          %s260 = smul.addr %s251, 128
          %s261 = scalar_lea.hbm %s3, %s260
          %s262 = smul.u32 8, %s254
          %s263 = sshll.u32 %s247, 4
          %s264 = int_to_ptr.vmem [resolvable:$true] %s263
          %s265 = sshll.u32 %s262, 4
          %269 = dma.vmem_to_hbm [thread:$0]  (%p259), %s264, %s265, %s261, %s244, 128, 128, 8
        $region40: #{tpu_custom_call.1} parent=31 // pred_fallthru
          _
      $region32: #{tpu_custom_call.1} parent=5 // pred_fallthru
        _
      %p270 = scmp.le.s32.totalorder 2, %s17
      // Predicated region
      $region41: #{tpu_custom_call.1} parent=5 // pred_check
        %p271 = pneg %p270
      $region42: #{tpu_custom_call.1} parent=5 // pred_check_branch
        %273 = sbr.rel (%p271) target = $region44
      $region43: #{tpu_custom_call.1} parent=5 // pred_region
        %s274 = ssub.s32 %s17, 2
        // Predicated region
        $region45: #{tpu_custom_call.1} parent=43 // pred_check
          %p275 = pneg %p114
        $region46: #{tpu_custom_call.1} parent=43 // pred_check_branch
          %277 = sbr.rel (%p275) target = $region48
        $region47: #{tpu_custom_call.1} parent=43 // pred_region
          %s278 = sand.u32 %s99, 1
          %s279 = scalar_lea.sflag [#allocation6], %s278
          %s280 = sand.u32 %s99, 1
          %s281 = smul.addr %s280, 32
          %s282 = scalar_lea.vmem [#allocation7], %s281
          %283 = dma.done %s279, 512
        $region48: #{tpu_custom_call.1} parent=43 // pred_fallthru
          _
      $region44: #{tpu_custom_call.1} parent=5 // pred_fallthru
        _
    $region6: #{tpu_custom_call.1} parent=1 // loop_footer
      %s21 = sadd.s32 1, %s17
    $region7: #{tpu_custom_call.1} parent=1 // loop_footer_branch
      %16 = sbr.rel target = $region3
    $region8: #{tpu_custom_call.1} parent=1 // loop_exit
      _
    %284 = vsyncpa [#allocation5], 1
    %s285 = scalar_lea.sflag [#allocation5], 1
    %286 = vsyncpa %s285, 1
    %287 = vsyncpa [#allocation6], 1
    %s288 = scalar_lea.sflag [#allocation6], 1
    %289 = vsyncpa %s288, 1

</llo_original>
